<compile_context>
chip_gen: v6e
topology: v6e:2x2x1
jax: 0.10.0
libtpu: 0.0.40
codegen_flags: <defaults>
</compile_context>

<pallas_src>
import math

import jax
import jax.numpy as jnp
from jax.experimental import pallas as pl
from jax.experimental.pallas import tpu as pltpu

_LANE = 128


# ---------------------------------------------------------------------------
# Kernel
# ---------------------------------------------------------------------------
def _critic_mlp_kernel(x_ref, w1_ref, b1_ref, w2t_ref, b2c_ref, w3c_ref,
                       b3_ref, o_ref):
    """One [TB, S] batch tile through the 3-layer value-head MLP.

    Layer 1 runs in the natural [TB, H] orientation; the activations are then
    transposed once so layers 2/3 (and the output store) keep the batch on the
    lane dimension -> dense [1, TB] stores instead of (TB, 1) masked ones.
    Garbage rows of a ragged final tile never mix across batch columns, and
    their outputs are masked on writeback.
    """
    # MXU inputs in the weights' dtype (bf16 by default), f32 accumulation.
    x = x_ref[...].astype(w1_ref.dtype)                               # [TB, S]

    # Layer 1 (MXU): h1 = relu(x @ w1 + b1)                             [TB, H]
    h1 = jnp.dot(x, w1_ref[...], preferred_element_type=jnp.float32)
    h1 = jnp.maximum(h1 + b1_ref[...], 0.0)

    # Single transpose so the batch lives on the lane dim from here on. [H, TB]
    h1t = h1.T.astype(w2t_ref.dtype)

    # Layer 2 (MXU): h2^T = relu(w2^T @ h1^T + b2)                      [H, TB]
    h2t = jnp.dot(w2t_ref[...], h1t, preferred_element_type=jnp.float32)
    h2t = jnp.maximum(h2t + b2c_ref[...], 0.0)

    # Layer 3 (VPU + sublane reduce): out = w3^T h2 + b3                [1, TB]
    out = jnp.sum(h2t * w3c_ref[...], axis=0, keepdims=True)
    o_ref[...] = out + b3_ref[...]


# ---------------------------------------------------------------------------
# Tiling / VMEM budgeting
# ---------------------------------------------------------------------------
def _round_up(x, m):
    return ((x + m - 1) // m) * m


def _tpu_defaults():
    """Per-generation (tile_row_cap, vmem_limit_bytes).

    v5e/v6e: 128 MiB VMEM -> raise the scoped limit to 64 MiB, allow 8K-row
    tiles.  v7x: 64 MiB VMEM (32 MiB scoped default) -> keep 32 MiB and cap
    tiles at 4K rows.  Unknown devices get the conservative v7x-like settings.
    """
    try:
        kind = jax.devices()[0].device_kind.lower()
    except Exception:  # pragma: no cover - device query failure
        kind = ""
    if "v7" in kind:
        return 4096, 32 * 1024 * 1024
    if "v5" in kind or "v6" in kind:
        return 8192, 64 * 1024 * 1024
    return 4096, 32 * 1024 * 1024


def _pick_tile_rows(B, S, H, cap, vmem_limit_bytes):
    """Pick TB from a VMEM budget.

    Accounts for (a) the double-buffered x tile being lane-padded to 128 lanes
    in VMEM, (b) the in-kernel bf16 copy of the x tile and (c) the f32 [TB, H]
    activation temporaries (h1, h1^T, h1^T bf16, h2^T) the compiler
    materializes.
    """
    s_pad = _round_up(max(S, _LANE), _LANE)
    per_row = 2 * s_pad * 4            # double-buffered f32 x tile (lane-padded)
    per_row += s_pad * 2               # in-kernel bf16 copy of the x tile
    per_row += H * (4 + 4 + 2 + 4)     # h1, h1^T, h1^T (bf16), h2^T
    budget = int(vmem_limit_bytes * 0.6)
    tb = budget // per_row
    tb = max(_LANE, min(cap, (tb // _LANE) * _LANE))
    return tb


# ---------------------------------------------------------------------------
# Pallas wrapper
# ---------------------------------------------------------------------------
def _critic_pallas(x, kparams, *, tile_rows=None):
    """x: [B, state_size] float32 -> [B] float32 (value head)."""
    w1, b1, w2t, b2c, w3c, b3 = kparams
    B, S = x.shape
    H = w1.shape[1]

    cap, vmem_limit = _tpu_defaults()
    if tile_rows is None:
        tb = _pick_tile_rows(B, S, H, cap, vmem_limit)
        # Keep >= 2 grid steps so the "parallel" batch axis can shard across
        # both TensorCores on v7x (negligible cost on single-TC v5e/v6e).
        tb = min(tb, _round_up(-(-B // 2), _LANE))
    else:
        tb = max(_LANE, (int(tile_rows) // _LANE) * _LANE)
    tb = min(tb, _round_up(B, _LANE))
    grid = (pl.cdiv(B, tb),)

    param_bytes = sum(int(p.size) * p.dtype.itemsize
                      for p in (w1, b1, w2t, b2c, w3c, b3))
    cost = pl.CostEstimate(
        flops=2 * B * (S * H + H * H + H),
        transcendentals=0,
        bytes_accessed=B * S * x.dtype.itemsize + param_bytes + B * 4,
    )

    const = lambda i: (0, 0)   # weights/biases: same block every step -> resident
    out = pl.pallas_call(
        _critic_mlp_kernel,
        out_shape=jax.ShapeDtypeStruct((1, B), jnp.float32),
        grid=grid,
        in_specs=[
            pl.BlockSpec((tb, S), lambda i: (i, 0)),   # x: streamed batch tiles
            pl.BlockSpec((S, H), const),               # w1          [S, H]
            pl.BlockSpec((1, H), const),               # b1          [1, H]
            pl.BlockSpec((H, H), const),               # w2^T        [H, H]
            pl.BlockSpec((H, 1), const),               # b2 (column) [H, 1]
            pl.BlockSpec((H, 1), const),               # w3 (column) [H, 1]
            pl.BlockSpec((1, 1), const),               # b3          [1, 1]
        ],
        out_specs=pl.BlockSpec((1, tb), lambda i: (0, i)),  # lane-dense rows
        compiler_params=pltpu.CompilerParams(
            dimension_semantics=("parallel",),
            vmem_limit_bytes=vmem_limit,
        ),
        cost_estimate=cost,
    )(x, w1, b1, w2t, b2c, w3c, b3)
    return out[0]                                           # [B]


# ---------------------------------------------------------------------------
# Parameters + forward (mirrors Critic.forward)
# ---------------------------------------------------------------------------
def init_critic_params(key, state_size, hidden=128):
    """PyTorch-style nn.Linear init: U(-1/sqrt(fan_in), +). Weights are [in, out]."""
    ks = jax.random.split(key, 6)

    def linear(kw, kb, fan_in, fan_out):
        bound = 1.0 / math.sqrt(fan_in)
        w = jax.random.uniform(kw, (fan_in, fan_out), jnp.float32, -bound, bound)
        b = jax.random.uniform(kb, (1, fan_out), jnp.float32, -bound, bound)
        return w, b

    w1, b1 = linear(ks[0], ks[1], state_size, hidden)
    w2, b2 = linear(ks[2], ks[3], hidden, hidden)
    w3, b3 = linear(ks[4], ks[5], hidden, 1)
    return (w1, b1, w2, b2, w3, b3)


def prepare_critic_params(params, mxu_dtype=jnp.bfloat16):
    """One-time packing of the f32 parameters for the Pallas kernel.

    Done once at init (not per call): MXU weights are pre-cast to `mxu_dtype`
    (bf16 by default; accumulation stays f32 in-kernel) and layer-2/3
    parameters are laid out for the transposed (lane-dense) half of the kernel.
    """
    w1, b1, w2, b2, w3, b3 = params
    return (
        w1.astype(mxu_dtype),                      # [S, H]
        b1.astype(jnp.float32),                    # [1, H]
        w2.T.astype(mxu_dtype),                    # [H, H]  (w2^T)
        b2.reshape(-1, 1).astype(jnp.float32),     # [H, 1]
        w3.reshape(-1, 1).astype(jnp.float32),     # [H, 1]
        b3.reshape(1, 1).astype(jnp.float32),      # [1, 1]
    )


def _mlp_jax(x, params):
    """Pure-JAX MLP (tiny-batch fallback path and correctness reference)."""
    w1, b1, w2, b2, w3, b3 = params
    h1 = jnp.maximum(x @ w1 + b1, 0.0)
    h2 = jnp.maximum(h1 @ w2 + b2, 0.0)
    return jnp.squeeze(h2 @ w3 + b3, axis=-1)


def critic_forward(state, params, batch_mode=False, *, kernel_params=None,
                   tile_rows=None, min_pallas_batch=512):
    """Mirrors Critic.forward: flatten, 3-layer value head, squeeze last dim.

    `params` are the f32 parameters (used for the small-batch fallback);
    `kernel_params` is the `prepare_critic_params` pack — prepare it once at
    init and pass it in to avoid per-call weight casting.
    """
    state = jnp.asarray(state, dtype=jnp.float32)
    if not batch_mode:
        state = state[None, ...]                 # unsqueeze(0)
    x = state.reshape(state.shape[0], -1)        # view(B, -1)
    B = x.shape[0]
    if B < max(min_pallas_batch, 2 * _LANE):
        # At tiny B the pallas_call is almost pure per-step overhead; XLA's
        # fused dot path is as fast or faster.
        return _mlp_jax(x, params)
    if kernel_params is None:
        kernel_params = prepare_critic_params(params)
    return _critic_pallas(x, kernel_params, tile_rows=tile_rows)    # [B]


def _reference_forward(state, params, batch_mode=False):
    """Pure-JAX reference for correctness checking."""
    state = jnp.asarray(state, dtype=jnp.float32)
    if not batch_mode:
        state = state[None, ...]
    return _mlp_jax(state.reshape(state.shape[0], -1), params)


# ---------------------------------------------------------------------------
# Self-test
# ---------------------------------------------------------------------------
if __name__ == "__main__":
    key = jax.random.PRNGKey(0)
    k_param, k_state = jax.random.split(key)

    # Observation is a [4, 8] grid -> state_size = 32.
    obs_shape = (4, 8)
    state_size = obs_shape[0] * obs_shape[1]
    params = init_critic_params(k_param, state_size)
    kparams_bf16 = prepare_critic_params(params)                       # default
    kparams_f32 = prepare_critic_params(params, mxu_dtype=jnp.float32)

    # Batch large enough for the Pallas path; tile_rows=256 gives a 3-step
    # grid with a ragged final tile (600 = 2*256 + 88), exercising the
    # pipelined / masked-lane-writeback path.
    batch = 600
    state = jax.random.normal(k_state, (batch,) + obs_shape, dtype=jnp.float32)
    ref = _reference_forward(state, params, batch_mode=True)

    # f32 MXU path: tight tolerance (only accumulation-order differences).
    out_f32 = jax.block_until_ready(
        critic_forward(state, params, batch_mode=True,
                       kernel_params=kparams_f32, tile_rows=256))
    assert out_f32.shape == (batch,), out_f32.shape
    assert jnp.allclose(out_f32, ref, atol=1e-4, rtol=1e-3), (
        float(jnp.max(jnp.abs(out_f32 - ref))))

    # Default bf16-MXU path (f32 accumulation) -> looser tolerance.
    out_bf16 = jax.block_until_ready(
        critic_forward(state, params, batch_mode=True,
                       kernel_params=kparams_bf16, tile_rows=256))
    assert out_bf16.shape == (batch,), out_bf16.shape
    assert jnp.allclose(out_bf16, ref, atol=1e-1, rtol=1e-1), (
        float(jnp.max(jnp.abs(out_bf16 - ref))))

    # Automatic tile selection (>= 2 grid steps so both v7x TCs get work).
    out_auto = jax.block_until_ready(
        critic_forward(state, params, batch_mode=True,
                       kernel_params=kparams_bf16))
    assert out_auto.shape == (batch,), out_auto.shape
    assert jnp.allclose(out_auto, ref, atol=1e-1, rtol=1e-1)

    # Tiny-batch paths bypass Pallas (pure launch overhead at that size).
    small = jax.block_until_ready(
        critic_forward(state[:2], params, batch_mode=True))
    assert small.shape == (2,), small.shape
    assert jnp.allclose(small, ref[:2], atol=1e-5, rtol=1e-5)

    single = jax.block_until_ready(critic_forward(state[0], params))
    assert single.shape == (1,), single.shape
    assert jnp.allclose(single, ref[:1], atol=1e-5, rtol=1e-5)

    print("KERNEL_OK")
</pallas_src>

<mosaic_0001>
module attributes {stable_mosaic.version = 11 : i64} {
  func.func @_critic_mlp_kernel(%arg0: i32, %arg1: memref<256x32xf32, #tpu.memory_space<vmem>>, %arg2: memref<32x128xf32, #tpu.memory_space<vmem>>, %arg3: memref<1x128xf32, #tpu.memory_space<vmem>>, %arg4: memref<128x128xf32, #tpu.memory_space<vmem>>, %arg5: memref<128x1xf32, #tpu.memory_space<vmem>>, %arg6: memref<128x1xf32, #tpu.memory_space<vmem>>, %arg7: memref<1x1xf32, #tpu.memory_space<vmem>>, %arg8: memref<1x256xf32, #tpu.memory_space<vmem>>) attributes {dimension_semantics = [#tpu.dimension_semantics<parallel>], iteration_bounds = array<i64: 3>, scalar_prefetch = 0 : i64, scratch_operands = 0 : i64, tpu.core_type = #tpu.core_type<tc>, window_params = [{transform_indices = @transform_0, window_bounds = array<i64: 256, 32>}, {pipeline_mode = #tpu.pipeline_mode<synchronous>, transform_indices = @transform_1, window_bounds = array<i64: 32, 128>}, {pipeline_mode = #tpu.pipeline_mode<synchronous>, transform_indices = @transform_2, window_bounds = array<i64: 1, 128>}, {pipeline_mode = #tpu.pipeline_mode<synchronous>, transform_indices = @transform_3, window_bounds = array<i64: 128, 128>}, {pipeline_mode = #tpu.pipeline_mode<synchronous>, transform_indices = @transform_4, window_bounds = array<i64: 128, 1>}, {pipeline_mode = #tpu.pipeline_mode<synchronous>, transform_indices = @transform_5, window_bounds = array<i64: 128, 1>}, {pipeline_mode = #tpu.pipeline_mode<synchronous>, transform_indices = @transform_6, window_bounds = array<i64: 1, 1>}, {transform_indices = @transform_7, window_bounds = array<i64: 1, 256>}]} {
    %c0 = arith.constant 0 : index
    %c0_0 = arith.constant 0 : index
    %0 = vector.load %arg1[%c0, %c0_0] : memref<256x32xf32, #tpu.memory_space<vmem>>, vector<256x32xf32>
    %c0_1 = arith.constant 0 : index
    %c0_2 = arith.constant 0 : index
    %1 = vector.load %arg2[%c0_1, %c0_2] : memref<32x128xf32, #tpu.memory_space<vmem>>, vector<32x128xf32>
    %cst = arith.constant dense<0.000000e+00> : vector<256x128xf32>
    %2 = tpu.matmul %0, %1, %cst {dimension_numbers = #tpu.dot_dimension_numbers<[1], [0], [0], [1], [0, 0, 1, 1], [], []>} : vector<256x32xf32>, vector<32x128xf32>, vector<256x128xf32> -> vector<256x128xf32>
    %c0_3 = arith.constant 0 : index
    %c0_4 = arith.constant 0 : index
    %3 = vector.load %arg3[%c0_3, %c0_4] : memref<1x128xf32, #tpu.memory_space<vmem>>, vector<1x128xf32>
    %4 = vector.broadcast %3 : vector<1x128xf32> to vector<256x128xf32>
    %5 = arith.addf %2, %4 : vector<256x128xf32>
    %cst_5 = arith.constant 0.000000e+00 : f32
    %6 = vector.broadcast %cst_5 : f32 to vector<256x128xf32>
    %7 = arith.maximumf %5, %6 : vector<256x128xf32>
    %8 = tpu.transpose %7, [1, 0] : vector<256x128xf32> -> vector<128x256xf32>
    %c0_6 = arith.constant 0 : index
    %c0_7 = arith.constant 0 : index
    %9 = vector.load %arg4[%c0_6, %c0_7] : memref<128x128xf32, #tpu.memory_space<vmem>>, vector<128x128xf32>
    %cst_8 = arith.constant dense<0.000000e+00> : vector<128x256xf32>
    %10 = tpu.matmul %9, %8, %cst_8 {dimension_numbers = #tpu.dot_dimension_numbers<[1], [0], [0], [1], [0, 0, 1, 1], [], []>} : vector<128x128xf32>, vector<128x256xf32>, vector<128x256xf32> -> vector<128x256xf32>
    %c0_9 = arith.constant 0 : index
    %c0_10 = arith.constant 0 : index
    %11 = vector.load %arg5[%c0_9, %c0_10] : memref<128x1xf32, #tpu.memory_space<vmem>>, vector<128x1xf32>
    %12 = vector.broadcast %11 : vector<128x1xf32> to vector<128x256xf32>
    %13 = arith.addf %10, %12 : vector<128x256xf32>
    %cst_11 = arith.constant 0.000000e+00 : f32
    %14 = vector.broadcast %cst_11 : f32 to vector<128x256xf32>
    %15 = arith.maximumf %13, %14 : vector<128x256xf32>
    %c0_12 = arith.constant 0 : index
    %c0_13 = arith.constant 0 : index
    %16 = vector.load %arg6[%c0_12, %c0_13] : memref<128x1xf32, #tpu.memory_space<vmem>>, vector<128x1xf32>
    %17 = vector.broadcast %16 : vector<128x1xf32> to vector<128x256xf32>
    %18 = arith.mulf %15, %17 : vector<128x256xf32>
    %cst_14 = arith.constant dense<0.000000e+00> : vector<256xf32>
    %19 = vector.multi_reduction <add>, %18, %cst_14 [0] : vector<128x256xf32> to vector<256xf32>
    %20 = vector.shape_cast %19 : vector<256xf32> to vector<1x256xf32>
    %c0_15 = arith.constant 0 : index
    %c0_16 = arith.constant 0 : index
    %21 = vector.load %arg7[%c0_15, %c0_16] : memref<1x1xf32, #tpu.memory_space<vmem>>, vector<1x1xf32>
    %22 = vector.broadcast %21 : vector<1x1xf32> to vector<1x256xf32>
    %23 = arith.addf %20, %22 : vector<1x256xf32>
    %c0_17 = arith.constant 0 : index
    %c0_18 = arith.constant 0 : index
    %24 = vector.load %arg8[%c0_17, %c0_18] : memref<1x256xf32, #tpu.memory_space<vmem>>, vector<1x256xf32>
    tpu.vector_store %arg8[%c0_17, %c0_18], %23 {strides = array<i32>} : memref<1x256xf32, #tpu.memory_space<vmem>>, vector<1x256xf32>,
    return
  }
  func.func @transform_0(%arg0: i32) -> (i32, i32) {
    %c0_i32 = arith.constant 0 : i32
    %c0_i32_0 = arith.constant 0 : i32
    return %arg0, %c0_i32 : i32, i32
  }
  func.func @transform_1(%arg0: i32) -> (i32, i32) {
    %c0_i32 = arith.constant 0 : i32
    %c0_i32_0 = arith.constant 0 : i32
    %c0_i32_1 = arith.constant 0 : i32
    return %c0_i32, %c0_i32_0 : i32, i32
  }
  func.func @transform_2(%arg0: i32) -> (i32, i32) {
    %c0_i32 = arith.constant 0 : i32
    %c0_i32_0 = arith.constant 0 : i32
    %c0_i32_1 = arith.constant 0 : i32
    return %c0_i32, %c0_i32_0 : i32, i32
  }
  func.func @transform_3(%arg0: i32) -> (i32, i32) {
    %c0_i32 = arith.constant 0 : i32
    %c0_i32_0 = arith.constant 0 : i32
    %c0_i32_1 = arith.constant 0 : i32
    return %c0_i32, %c0_i32_0 : i32, i32
  }
  func.func @transform_4(%arg0: i32) -> (i32, i32) {
    %c0_i32 = arith.constant 0 : i32
    %c0_i32_0 = arith.constant 0 : i32
    %c0_i32_1 = arith.constant 0 : i32
    return %c0_i32, %c0_i32_0 : i32, i32
  }
  func.func @transform_5(%arg0: i32) -> (i32, i32) {
    %c0_i32 = arith.constant 0 : i32
    %c0_i32_0 = arith.constant 0 : i32
    %c0_i32_1 = arith.constant 0 : i32
    return %c0_i32, %c0_i32_0 : i32, i32
  }
  func.func @transform_6(%arg0: i32) -> (i32, i32) {
    %c0_i32 = arith.constant 0 : i32
    %c0_i32_0 = arith.constant 0 : i32
    %c0_i32_1 = arith.constant 0 : i32
    return %c0_i32, %c0_i32_0 : i32, i32
  }
  func.func @transform_7(%arg0: i32) -> (i32, i32) {
    %c0_i32 = arith.constant 0 : i32
    %c0_i32_0 = arith.constant 0 : i32
    return %c0_i32, %arg0 : i32, i32
  }
}

</mosaic_0001>

<llo_original>
// kernel: tpu_custom_call.1
$region0: #{tpu_custom_call.1}
  #allocation0 [shape = 'u32[]', space=smem, size = 0x4, offset = 0x4, fixed_abs, tag = 'smem constant byte address 0x4 - core index']
  #allocation1 [shape = 'u32[144,128]{1,0:T(1,128)}', space=vmem, size = 0x12000, scoped, tag = 'internal scratch']
  #allocation2 [shape = 'f32[1,1]{1,0:T(1,128)S(1)}', space=vmem, size = 0x200, scoped, tag = 'scoped memory for tpu_custom_call.1']
  %s0 = inlined_call_operand.vmem [shape: f32[600,32], index: 0, kind: input, shape index: {}]
  %s1 = inlined_call_operand.vmem [shape: f32[32,128], index: 1, kind: input, shape index: {}]
  %s2 = inlined_call_operand.vmem [shape: f32[1,128], index: 2, kind: input, shape index: {}]
  %s3 = inlined_call_operand.vmem [shape: f32[128,128], index: 3, kind: input, shape index: {}]
  %s4 = inlined_call_operand.vmem [shape: f32[128,1], index: 4, kind: input, shape index: {}]
  %s5 = inlined_call_operand.vmem [shape: f32[128,1], index: 5, kind: input, shape index: {}]
  %s6 = inlined_call_operand.<no memory space> [shape: f32[1,1], index: 6, kind: input, shape index: {}]
  %s7 = inlined_call_operand.hbm [shape: f32[1,600], index: 7, kind: output, shape index: {}]
  %s8 = sld [smem:[#allocation0]]
  $region61: #{tpu_custom_call.1} parent=0
    _
  %s10 = ssub.s32 1, %s8
  %s11 = scalar_select 0, %s10, %s8
  %v12 = vstv %s6
  %13 = vst [vmem:[#allocation2] sm:$0x1] %v12
  $region1: #{tpu_custom_call.1} parent=0
    #allocation3 [shape = 'u8[2048]{0}', space=vmem, size = 0x800, scoped, tag = 'output window, operand 0']
    #allocation4 [shape = 's32[2]{0}', space=sflag, size = 0x8, scoped, tag = 'scoped memory for tpu_custom_call.1']
    %14 = vsyncpa [#allocation4], 0
    %s15 = scalar_lea.sflag [#allocation4], 1
    %16 = vsyncpa %s15, 0
    loop: start=0, step=1, limit=5
    $region2: #{tpu_custom_call.1} parent=1 // loop_pre_header
      _
    $region3: #{tpu_custom_call.1} parent=1 // loop_header
      %s18 = sphi 0, %s22
      %p19 = scmp.ge.s32.totalorder %s18, 5
      %s28 = sphi 0, %s30
      %s31 = sphi 0, %s28
      %s32 = sphi 0, %s31
      %s48 = sphi 0, %s32
      %s52 = sphi 0, %s52
      %s54 = sphi 0, %s52
      %s55 = sphi 0, %s54
      %s69 = sphi 0, %s55
      %s73 = sphi 0, %s73
      %s75 = sphi 0, %s73
      %s76 = sphi 0, %s75
      %s90 = sphi 0, %s76
      %s94 = sphi 0, %s94
      %s96 = sphi 0, %s94
      %s97 = sphi 0, %s96
      %s111 = sphi 0, %s97
      %s115 = sphi 0, %s115
      %s117 = sphi 0, %s115
      %s118 = sphi 0, %s117
      %s132 = sphi 0, %s118
      %s136 = sphi 0, %s136
      %s138 = sphi 0, %s136
      %s139 = sphi 0, %s138
      %s153 = sphi 0, %s139
      %s157 = sphi 0, %s157
      %s159 = sphi 0, %s157
      %s160 = sphi 0, %s159
      %s174 = sphi 0, %s160
      %s180 = sphi 0, %s182
      %s183 = sphi 0, %s180
      %s184 = sphi 0, %s183
      %s200 = sphi 0, %s184
    $region4: #{tpu_custom_call.1} parent=1 // loop_header_branch
      %21 = sbr.rel (%p19) target = $region8
    $region5: #{tpu_custom_call.1} parent=1 // loop_body
      %s23 = ssub.s32 %s18, 1
      %s24 = ssub.s32 %s18, 2
      %s25 = sadd.s32 %s18, 1
      %s26 = ssub.s32 %s18, %s25
      %p27 = scmp.eq.s32.totalorder %s26, 0
      %s29 = sadd.s32 %s28, 1
      %s30 = scalar_select %p27, %s28, %s29
      %p33 = pneg %p27
      %p34 = scmp.eq.s32.totalorder %s18, 2
      %p35 = por %p33, %p34
      %p36 = scmp.ne.s32.totalorder %s28, %s31
      %p37 = scmp.eq.s32.totalorder %s18, 0
      %p38 = por %p36, %p37
      %p39 = scmp.ne.s32.totalorder %s28, %s31
      %p40 = scmp.eq.s32.totalorder %s23, 2
      %p41 = por %p39, %p40
      %p42 = scmp.ne.s32.totalorder %s31, %s32
      %p43 = scmp.eq.s32.totalorder %s23, 0
      %p44 = por %p42, %p43
      %p45 = scmp.ne.s32.totalorder %s31, %s32
      %p46 = scmp.eq.s32.totalorder %s24, 2
      %p47 = por %p45, %p46
      %p49 = scmp.ne.s32.totalorder %s32, %s48
      %p50 = scmp.eq.s32.totalorder %s24, 0
      %p51 = por %p49, %p50
      %s53 = sadd.s32 %s52, 1
      %p56 = scmp.eq.s32.totalorder %s18, 2
      %p57 = scmp.ne.s32.totalorder %s52, %s54
      %p58 = scmp.eq.s32.totalorder %s18, 0
      %p59 = por %p57, %p58
      %p60 = scmp.ne.s32.totalorder %s52, %s54
      %p61 = scmp.eq.s32.totalorder %s23, 2
      %p62 = por %p60, %p61
      %p63 = scmp.ne.s32.totalorder %s54, %s55
      %p64 = scmp.eq.s32.totalorder %s23, 0
      %p65 = por %p63, %p64
      %p66 = scmp.ne.s32.totalorder %s54, %s55
      %p67 = scmp.eq.s32.totalorder %s24, 2
      %p68 = por %p66, %p67
      %p70 = scmp.ne.s32.totalorder %s55, %s69
      %p71 = scmp.eq.s32.totalorder %s24, 0
      %p72 = por %p70, %p71
      %s74 = sadd.s32 %s73, 1
      %p77 = scmp.eq.s32.totalorder %s18, 2
      %p78 = scmp.ne.s32.totalorder %s73, %s75
      %p79 = scmp.eq.s32.totalorder %s18, 0
      %p80 = por %p78, %p79
      %p81 = scmp.ne.s32.totalorder %s73, %s75
      %p82 = scmp.eq.s32.totalorder %s23, 2
      %p83 = por %p81, %p82
      %p84 = scmp.ne.s32.totalorder %s75, %s76
      %p85 = scmp.eq.s32.totalorder %s23, 0
      %p86 = por %p84, %p85
      %p87 = scmp.ne.s32.totalorder %s75, %s76
      %p88 = scmp.eq.s32.totalorder %s24, 2
      %p89 = por %p87, %p88
      %p91 = scmp.ne.s32.totalorder %s76, %s90
      %p92 = scmp.eq.s32.totalorder %s24, 0
      %p93 = por %p91, %p92
      %s95 = sadd.s32 %s94, 1
      %p98 = scmp.eq.s32.totalorder %s18, 2
      %p99 = scmp.ne.s32.totalorder %s94, %s96
      %p100 = scmp.eq.s32.totalorder %s18, 0
      %p101 = por %p99, %p100
      %p102 = scmp.ne.s32.totalorder %s94, %s96
      %p103 = scmp.eq.s32.totalorder %s23, 2
      %p104 = por %p102, %p103
      %p105 = scmp.ne.s32.totalorder %s96, %s97
      %p106 = scmp.eq.s32.totalorder %s23, 0
      %p107 = por %p105, %p106
      %p108 = scmp.ne.s32.totalorder %s96, %s97
      %p109 = scmp.eq.s32.totalorder %s24, 2
      %p110 = por %p108, %p109
      %p112 = scmp.ne.s32.totalorder %s97, %s111
      %p113 = scmp.eq.s32.totalorder %s24, 0
      %p114 = por %p112, %p113
      %s116 = sadd.s32 %s115, 1
      %p119 = scmp.eq.s32.totalorder %s18, 2
      %p120 = scmp.ne.s32.totalorder %s115, %s117
      %p121 = scmp.eq.s32.totalorder %s18, 0
      %p122 = por %p120, %p121
      %p123 = scmp.ne.s32.totalorder %s115, %s117
      %p124 = scmp.eq.s32.totalorder %s23, 2
      %p125 = por %p123, %p124
      %p126 = scmp.ne.s32.totalorder %s117, %s118
      %p127 = scmp.eq.s32.totalorder %s23, 0
      %p128 = por %p126, %p127
      %p129 = scmp.ne.s32.totalorder %s117, %s118
      %p130 = scmp.eq.s32.totalorder %s24, 2
      %p131 = por %p129, %p130
      %p133 = scmp.ne.s32.totalorder %s118, %s132
      %p134 = scmp.eq.s32.totalorder %s24, 0
      %p135 = por %p133, %p134
      %s137 = sadd.s32 %s136, 1
      %p140 = scmp.eq.s32.totalorder %s18, 2
      %p141 = scmp.ne.s32.totalorder %s136, %s138
      %p142 = scmp.eq.s32.totalorder %s18, 0
      %p143 = por %p141, %p142
      %p144 = scmp.ne.s32.totalorder %s136, %s138
      %p145 = scmp.eq.s32.totalorder %s23, 2
      %p146 = por %p144, %p145
      %p147 = scmp.ne.s32.totalorder %s138, %s139
      %p148 = scmp.eq.s32.totalorder %s23, 0
      %p149 = por %p147, %p148
      %p150 = scmp.ne.s32.totalorder %s138, %s139
      %p151 = scmp.eq.s32.totalorder %s24, 2
      %p152 = por %p150, %p151
      %p154 = scmp.ne.s32.totalorder %s139, %s153
      %p155 = scmp.eq.s32.totalorder %s24, 0
      %p156 = por %p154, %p155
      %s158 = sadd.s32 %s157, 1
      %p161 = scmp.eq.s32.totalorder %s18, 2
      %p162 = scmp.ne.s32.totalorder %s157, %s159
      %p163 = scmp.eq.s32.totalorder %s18, 0
      %p164 = por %p162, %p163
      %p165 = scmp.ne.s32.totalorder %s157, %s159
      %p166 = scmp.eq.s32.totalorder %s23, 2
      %p167 = por %p165, %p166
      %p168 = scmp.ne.s32.totalorder %s159, %s160
      %p169 = scmp.eq.s32.totalorder %s23, 0
      %p170 = por %p168, %p169
      %p171 = scmp.ne.s32.totalorder %s159, %s160
      %p172 = scmp.eq.s32.totalorder %s24, 2
      %p173 = por %p171, %p172
      %p175 = scmp.ne.s32.totalorder %s160, %s174
      %p176 = scmp.eq.s32.totalorder %s24, 0
      %p177 = por %p175, %p176
      %s178 = ssub.s32 %s18, %s25
      %p179 = scmp.eq.s32.totalorder %s178, 0
      %s181 = sadd.s32 %s180, 1
      %s182 = scalar_select %p179, %s180, %s181
      %p185 = pneg %p179
      %p186 = scmp.eq.s32.totalorder %s18, 2
      %p187 = por %p185, %p186
      %p188 = scmp.ne.s32.totalorder %s180, %s183
      %p189 = scmp.eq.s32.totalorder %s18, 0
      %p190 = por %p188, %p189
      %p191 = scmp.ne.s32.totalorder %s180, %s183
      %p192 = scmp.eq.s32.totalorder %s23, 2
      %p193 = por %p191, %p192
      %p194 = scmp.ne.s32.totalorder %s183, %s184
      %p195 = scmp.eq.s32.totalorder %s23, 0
      %p196 = por %p194, %p195
      %p197 = scmp.ne.s32.totalorder %s183, %s184
      %p198 = scmp.eq.s32.totalorder %s24, 2
      %p199 = por %p197, %p198
      %p201 = scmp.ne.s32.totalorder %s184, %s200
      %p202 = scmp.eq.s32.totalorder %s24, 0
      %p203 = por %p201, %p202
      %p204 = scmp.le.s32.totalorder 1, %s18
      %p205 = scmp.lt.s32.totalorder %s18, 4
      %p206 = pnand %p204, %p205
      %p207 = pneg %p206
      // Predicated region
      $region9: #{tpu_custom_call.1} parent=5 // pred_check
        _
      $region10: #{tpu_custom_call.1} parent=5 // pred_check_branch
        %209 = sbr.rel (%p206) target = $region12
      $region11: #{tpu_custom_call.1} parent=5 // pred_region
        %s210 = ssub.s32 %s18, 1
        // Predicated region
        $region13: #{tpu_custom_call.1} parent=11 // pred_check
          %p211 = pneg %p65
        $region14: #{tpu_custom_call.1} parent=11 // pred_check_branch
          %213 = sbr.rel (%p211) target = $region16
        $region15: #{tpu_custom_call.1} parent=11 // pred_region
          _
        $region16: #{tpu_custom_call.1} parent=11 // pred_fallthru
          _
        // Predicated region
        $region17: #{tpu_custom_call.1} parent=11 // pred_check
          %p214 = pneg %p86
        $region18: #{tpu_custom_call.1} parent=11 // pred_check_branch
          %216 = sbr.rel (%p214) target = $region20
        $region19: #{tpu_custom_call.1} parent=11 // pred_region
          _
        $region20: #{tpu_custom_call.1} parent=11 // pred_fallthru
          _
        // Predicated region
        $region21: #{tpu_custom_call.1} parent=11 // pred_check
          %p217 = pneg %p107
        $region22: #{tpu_custom_call.1} parent=11 // pred_check_branch
          %219 = sbr.rel (%p217) target = $region24
        $region23: #{tpu_custom_call.1} parent=11 // pred_region
          _
        $region24: #{tpu_custom_call.1} parent=11 // pred_fallthru
          _
        // Predicated region
        $region25: #{tpu_custom_call.1} parent=11 // pred_check
          %p220 = pneg %p128
        $region26: #{tpu_custom_call.1} parent=11 // pred_check_branch
          %222 = sbr.rel (%p220) target = $region28
        $region27: #{tpu_custom_call.1} parent=11 // pred_region
          _
        $region28: #{tpu_custom_call.1} parent=11 // pred_fallthru
          _
        // Predicated region
        $region29: #{tpu_custom_call.1} parent=11 // pred_check
          %p223 = pneg %p149
        $region30: #{tpu_custom_call.1} parent=11 // pred_check_branch
          %225 = sbr.rel (%p223) target = $region32
        $region31: #{tpu_custom_call.1} parent=11 // pred_region
          _
        $region32: #{tpu_custom_call.1} parent=11 // pred_fallthru
          _
        // Predicated region
        $region33: #{tpu_custom_call.1} parent=11 // pred_check
          %p226 = pneg %p170
        $region34: #{tpu_custom_call.1} parent=11 // pred_check_branch
          %228 = sbr.rel (%p226) target = $region36
        $region35: #{tpu_custom_call.1} parent=11 // pred_region
          _
        $region36: #{tpu_custom_call.1} parent=11 // pred_fallthru
          _
      $region12: #{tpu_custom_call.1} parent=5 // pred_fallthru
        _
      %p229 = scmp.lt.s32.totalorder %s18, 3
      // Predicated region
      $region37: #{tpu_custom_call.1} parent=5 // pred_check
        %p230 = pneg %p229
      $region38: #{tpu_custom_call.1} parent=5 // pred_check_branch
        %232 = sbr.rel (%p230) target = $region40
      $region39: #{tpu_custom_call.1} parent=5 // pred_region
        // Predicated region
        $region41: #{tpu_custom_call.1} parent=39 // pred_check
          %p233 = pneg %p38
        $region42: #{tpu_custom_call.1} parent=39 // pred_check_branch
          %235 = sbr.rel (%p233) target = $region44
        $region43: #{tpu_custom_call.1} parent=39 // pred_region
          %s236 = smul.u32 32, %s18
          %s237 = ssub.s32 75, %s236
          %p238 = scmp.lt.s32.totalorder %s237, 32
          %s239 = scalar_select %p238, %s237, 32
          %s240 = smul.u32 128, %s239
          %p241 = scmp.lt.s32.totalorder %s236, 74
          %s242 = scalar_select %p241, %s236, 74
          %s243 = smul.addr %s242, 8
          %s244 = scalar_lea.vmem %s0, %s243
          %s245 = smul.u32 32, %s18
          %s246 = ssub.s32 75, %s245
          %p247 = scmp.lt.s32.totalorder %s246, 32
          %s248 = scalar_select %p247, %s246, 32
          %s249 = smul.u32 128, %s248
        $region44: #{tpu_custom_call.1} parent=39 // pred_fallthru
          _
      $region40: #{tpu_custom_call.1} parent=5 // pred_fallthru
        _
      %p250 = scmp.le.s32.totalorder 1, %s18
      %p251 = scmp.lt.s32.totalorder %s18, 4
      %p252 = pnand %p250, %p251
      %p253 = pneg %p252
      // Predicated region
      $region45: #{tpu_custom_call.1} parent=5 // pred_check
        _
      $region46: #{tpu_custom_call.1} parent=5 // pred_check_branch
        %255 = sbr.rel (%p252) target = $region48
      $region47: #{tpu_custom_call.1} parent=5 // pred_region
        %s256 = ssub.s32 %s18, 1
        %s257 = smul.u32 32, %s23
        %s258 = ssub.s32 75, %s257
        %p259 = scmp.lt.s32.totalorder %s258, 32
        %s260 = scalar_select %p259, %s258, 32
        %s261 = smul.u32 128, %s260
        %p262 = scmp.lt.s32.totalorder %s257, 74
        %s263 = scalar_select %p262, %s257, 74
        %s264 = smul.addr %s263, 8
        %s265 = scalar_lea.vmem %s0, %s264
        %p266 = pneg %p44
        %p267 = pneg %p41
        %p268 = pneg %p65
        %p269 = pneg %p62
        %p270 = pneg %p86
        %p271 = pneg %p83
        %p272 = pneg %p107
        %p273 = pneg %p104
        %p274 = pneg %p128
        %p275 = pneg %p125
        %p276 = pneg %p149
        %p277 = pneg %p146
        %p278 = pneg %p170
        %p279 = pneg %p167
        %p280 = pneg %p196
        %p281 = pneg %p193
        %s282 = sand.u32 %s183, 1
        %s283 = scalar_lea.sflag [#allocation4], %s282
        %s284 = sand.u32 %s183, 1
        %s285 = smul.addr %s284, 2
        %s286 = scalar_lea.vmem [#allocation3], %s285
        %s287 = smul.u32 32, %s23
        %s288 = ssub.s32 75, %s287
        %p289 = scmp.lt.s32.totalorder %s288, 32
        %s290 = scalar_select %p289, %s288, 32
        %s291 = smul.u32 128, %s290
        %p292 = scmp.lt.s32.totalorder %s287, 74
        %s293 = scalar_select %p292, %s287, 74
        %s294 = smul.addr %s293, 8
        %s295 = scalar_lea.vmem %s0, %s294
        %s296 = smul.u32 32, %s23
        %s297 = ssub.s32 75, %s296
        %p298 = scmp.lt.s32.totalorder %s297, 32
        %s299 = scalar_select %p298, %s297, 32
        %s300 = smul.u32 128, %s299
        %s301 = smul.u32 2, %s23
        %s302 = ssub.s32 5, %s301
        %p303 = scmp.lt.s32.totalorder %s302, 2
        %s304 = scalar_select %p303, %s302, 2
        %s305 = smul.u32 16, %s304
        %v306 = vld [vmem:[%s295] sm:$0xff]
        %v307 = vld [vmem:[%s295 + $0x8] sm:$0xff]
        %v308 = vld [vmem:[%s295 + $0x10] sm:$0xff]
        %v309 = vld [vmem:[%s295 + $0x18] sm:$0xff]
        %v310 = vld [vmem:[%s295 + $0x20] sm:$0xff]
        %v311 = vld [vmem:[%s295 + $0x28] sm:$0xff]
        %v312 = vld [vmem:[%s295 + $0x30] sm:$0xff]
        %v313 = vld [vmem:[%s295 + $0x38] sm:$0xff]
        %v314 = vld [vmem:[%s295 + $0x40] sm:$0xff]
        %v315 = vld [vmem:[%s295 + $0x48] sm:$0xff]
        %v316 = vld [vmem:[%s295 + $0x50] sm:$0xff]
        %v317 = vld [vmem:[%s295 + $0x58] sm:$0xff]
        %v318 = vld [vmem:[%s295 + $0x60] sm:$0xff]
        %v319 = vld [vmem:[%s295 + $0x68] sm:$0xff]
        %v320 = vld [vmem:[%s295 + $0x70] sm:$0xff]
        %v321 = vld [vmem:[%s295 + $0x78] sm:$0xff]
        %v322 = vld [vmem:[%s295 + $0x80] sm:$0xff]
        %v323 = vld [vmem:[%s295 + $0x88] sm:$0xff]
        %v324 = vld [vmem:[%s295 + $0x90] sm:$0xff]
        %v325 = vld [vmem:[%s295 + $0x98] sm:$0xff]
        %v326 = vld [vmem:[%s295 + $0xa0] sm:$0xff]
        %v327 = vld [vmem:[%s295 + $0xa8] sm:$0xff]
        %v328 = vld [vmem:[%s295 + $0xb0] sm:$0xff]
        %v329 = vld [vmem:[%s295 + $0xb8] sm:$0xff]
        %v330 = vld [vmem:[%s295 + $0xc0] sm:$0xff]
        %v331 = vld [vmem:[%s295 + $0xc8] sm:$0xff]
        %v332 = vld [vmem:[%s295 + $0xd0] sm:$0xff]
        %v333 = vld [vmem:[%s295 + $0xd8] sm:$0xff]
        %v334 = vld [vmem:[%s295 + $0xe0] sm:$0xff]
        %v335 = vld [vmem:[%s295 + $0xe8] sm:$0xff]
        %v336 = vld [vmem:[%s295 + $0xf0] sm:$0xff]
        %v337 = vld [vmem:[%s295 + $0xf8] sm:$0xff]
        %v338 = vld [vmem:[%s1] sm:$0xff]
        %v339 = vld [vmem:[%s1 + $0x8] sm:$0xff]
        %v340 = vld [vmem:[%s1 + $0x10] sm:$0xff]
        %v341 = vld [vmem:[%s1 + $0x18] sm:$0xff]
        %v342 = vld [vmem:[%s2] sm:$0x1]
        %v344 = vlaneseq
        %v345 = vshrl.u32 %v344, 7
        %v346 = vsub.s32 0, %v345
        %v347 = vrot.slane %v342, %v346
        %vm349 = vcmask 261120
        %v351 = vsel %vm349, %v306, 0
        %v354 = vsel %vm349, %v307, 0
        %v357 = vsel %vm349, %v308, 0
        %v360 = vsel %vm349, %v309, 0
        %v363 = vsel %vm349, %v310, 0
        %v366 = vsel %vm349, %v311, 0
        %v369 = vsel %vm349, %v312, 0
        %v372 = vsel %vm349, %v313, 0
        %v375 = vsel %vm349, %v314, 0
        %v378 = vsel %vm349, %v315, 0
        %v381 = vsel %vm349, %v316, 0
        %v384 = vsel %vm349, %v317, 0
        %v387 = vsel %vm349, %v318, 0
        %v390 = vsel %vm349, %v319, 0
        %v393 = vsel %vm349, %v320, 0
        %v396 = vsel %vm349, %v321, 0
        %v399 = vsel %vm349, %v322, 0
        %v402 = vsel %vm349, %v323, 0
        %v405 = vsel %vm349, %v324, 0
        %v408 = vsel %vm349, %v325, 0
        %v411 = vsel %vm349, %v326, 0
        %v414 = vsel %vm349, %v327, 0
        %v417 = vsel %vm349, %v328, 0
        %v420 = vsel %vm349, %v329, 0
        %v423 = vsel %vm349, %v330, 0
        %v426 = vsel %vm349, %v331, 0
        %v429 = vsel %vm349, %v332, 0
        %v432 = vsel %vm349, %v333, 0
        %v435 = vsel %vm349, %v334, 0
        %v438 = vsel %vm349, %v335, 0
        %v441 = vsel %vm349, %v336, 0
        %v444 = vsel %vm349, %v337, 0
        %446 = vmatprep.subr.mxu0 0.0
        %447 = vmatpush1.msra.mxu0 0.0
        %448 = vmatprep.subr.mxu0 0.0
        %449 = vmatpush1.msra.mxu0 0.0
        %450 = vmatprep.subr.mxu0 0.0
        %451 = vmatpush1.msra.mxu0 0.0
        %452 = vmatprep.subr.mxu0 0.0
        %453 = vmatpush1.msra.mxu0 0.0
        %454 = vmatprep.subr.mxu0 0.0
        %455 = vmatpush1.msra.mxu0 0.0
        %456 = vmatprep.subr.mxu0 0.0
        %457 = vmatpush1.msra.mxu0 0.0
        %458 = vmatprep.subr.mxu0 0.0
        %459 = vmatpush1.msra.mxu0 0.0
        %460 = vmatprep.subr.mxu0 0.0
        %461 = vmatpush1.msra.mxu0 0.0
        %462 = vmatprep.subr.mxu0 0.0
        %463 = vmatpush1.msra.mxu0 0.0
        %464 = vmatprep.subr.mxu0 0.0
        %465 = vmatpush1.msra.mxu0 0.0
        %466 = vmatprep.subr.mxu0 0.0
        %467 = vmatpush1.msra.mxu0 0.0
        %468 = vmatprep.subr.mxu0 0.0
        %469 = vmatpush1.msra.mxu0 0.0
        %470 = vmatprep.subr.mxu0 0.0
        %471 = vmatpush1.msra.mxu0 %v341
        %472 = vmatprep.subr.mxu0 0.0
        %473 = vmatpush1.msra.mxu0 %v340
        %474 = vmatprep.subr.mxu0 0.0
        %475 = vmatpush1.msra.mxu0 %v339
        %476 = vmatprep.subr.mxu0 0.0
        %477 = vmatpush1.msra.mxu0 %v338
        %478 = vmatprep.subr.mxu0 0.0
        %479 = vmatpush2.msra.mxu0 0.0
        %480 = vmatprep.subr.mxu0 0.0
        %481 = vmatpush2.msra.mxu0 0.0
        %482 = vmatprep.subr.mxu0 0.0
        %483 = vmatpush2.msra.mxu0 0.0
        %484 = vmatprep.subr.mxu0 0.0
        %485 = vmatpush2.msra.mxu0 0.0
        %486 = vmatprep.subr.mxu0 0.0
        %487 = vmatpush2.msra.mxu0 0.0
        %488 = vmatprep.subr.mxu0 0.0
        %489 = vmatpush2.msra.mxu0 0.0
        %490 = vmatprep.subr.mxu0 0.0
        %491 = vmatpush2.msra.mxu0 0.0
        %492 = vmatprep.subr.mxu0 0.0
        %493 = vmatpush2.msra.mxu0 0.0
        %494 = vmatprep.subr.mxu0 0.0
        %495 = vmatpush2.msra.mxu0 0.0
        %496 = vmatprep.subr.mxu0 0.0
        %497 = vmatpush2.msra.mxu0 0.0
        %498 = vmatprep.subr.mxu0 0.0
        %499 = vmatpush2.msra.mxu0 0.0
        %500 = vmatprep.subr.mxu0 0.0
        %501 = vmatpush2.msra.mxu0 0.0
        %502 = vmatprep.subr.mxu0 0.0
        %503 = vmatpush2.msra.mxu0 0.0
        %504 = vmatprep.subr.mxu0 0.0
        %505 = vmatpush2.msra.mxu0 0.0
        %506 = vmatprep.subr.mxu0 0.0
        %507 = vmatpush2.msra.mxu0 0.0
        %508 = vmatprep.subr.mxu0 0.0
        %509 = vmatpush2.msra.mxu0 0.0
        %510 = vmatprep.mubr.f32.mxu0 0.0
        %511 = vmatmul.mubr.f32.gmra.mxu0 %v351
        %v512 = vpop.f32.mrf.mxu0
        %v513 = vadd.f32 %v347, %v512
        %v514 = vpop.f32.mrf.mxu0
        %515 = vmatprep.mubr.f32.mxu0 0.0
        %516 = vmatmul.mubr.f32.gmra.mxu0 %v354
        %v517 = vpop.f32.mrf.mxu0
        %v518 = vadd.f32 %v347, %v517
        %v519 = vpop.f32.mrf.mxu0
        %520 = vmatprep.mubr.f32.mxu0 0.0
        %521 = vmatmul.mubr.f32.gmra.mxu0 %v357
        %v522 = vpop.f32.mrf.mxu0
        %v523 = vadd.f32 %v347, %v522
        %v524 = vpop.f32.mrf.mxu0
        %525 = vmatprep.mubr.f32.mxu0 0.0
        %526 = vmatmul.mubr.f32.gmra.mxu0 %v360
        %v527 = vpop.f32.mrf.mxu0
        %v528 = vadd.f32 %v347, %v527
        %v529 = vpop.f32.mrf.mxu0
        %530 = vmatprep.mubr.f32.mxu0 0.0
        %531 = vmatmul.mubr.f32.gmra.mxu0 %v363
        %v532 = vpop.f32.mrf.mxu0
        %v533 = vadd.f32 %v347, %v532
        %v534 = vpop.f32.mrf.mxu0
        %535 = vmatprep.mubr.f32.mxu0 0.0
        %536 = vmatmul.mubr.f32.gmra.mxu0 %v366
        %v537 = vpop.f32.mrf.mxu0
        %v538 = vadd.f32 %v347, %v537
        %v539 = vpop.f32.mrf.mxu0
        %540 = vmatprep.mubr.f32.mxu0 0.0
        %541 = vmatmul.mubr.f32.gmra.mxu0 %v369
        %v542 = vpop.f32.mrf.mxu0
        %v543 = vadd.f32 %v347, %v542
        %v544 = vpop.f32.mrf.mxu0
        %545 = vmatprep.mubr.f32.mxu0 0.0
        %546 = vmatmul.mubr.f32.gmra.mxu0 %v372
        %v547 = vpop.f32.mrf.mxu0
        %v548 = vadd.f32 %v347, %v547
        %v549 = vpop.f32.mrf.mxu0
        %550 = vmatprep.mubr.f32.mxu0 0.0
        %551 = vmatmul.mubr.f32.gmra.mxu0 %v375
        %v552 = vpop.f32.mrf.mxu0
        %v553 = vadd.f32 %v347, %v552
        %v554 = vpop.f32.mrf.mxu0
        %555 = vmatprep.mubr.f32.mxu0 0.0
        %556 = vmatmul.mubr.f32.gmra.mxu0 %v378
        %v557 = vpop.f32.mrf.mxu0
        %v558 = vadd.f32 %v347, %v557
        %v559 = vpop.f32.mrf.mxu0
        %560 = vmatprep.mubr.f32.mxu0 0.0
        %561 = vmatmul.mubr.f32.gmra.mxu0 %v381
        %v562 = vpop.f32.mrf.mxu0
        %v563 = vadd.f32 %v347, %v562
        %v564 = vpop.f32.mrf.mxu0
        %565 = vmatprep.mubr.f32.mxu0 0.0
        %566 = vmatmul.mubr.f32.gmra.mxu0 %v384
        %v567 = vpop.f32.mrf.mxu0
        %v568 = vadd.f32 %v347, %v567
        %v569 = vpop.f32.mrf.mxu0
        %570 = vmatprep.mubr.f32.mxu0 0.0
        %571 = vmatmul.mubr.f32.gmra.mxu0 %v387
        %v572 = vpop.f32.mrf.mxu0
        %v573 = vadd.f32 %v347, %v572
        %v574 = vpop.f32.mrf.mxu0
        %575 = vmatprep.mubr.f32.mxu0 0.0
        %576 = vmatmul.mubr.f32.gmra.mxu0 %v390
        %v577 = vpop.f32.mrf.mxu0
        %v578 = vadd.f32 %v347, %v577
        %v579 = vpop.f32.mrf.mxu0
        %580 = vmatprep.mubr.f32.mxu0 0.0
        %581 = vmatmul.mubr.f32.gmra.mxu0 %v393
        %v582 = vpop.f32.mrf.mxu0
        %v583 = vadd.f32 %v347, %v582
        %v584 = vpop.f32.mrf.mxu0
        %585 = vmatprep.mubr.f32.mxu0 0.0
        %586 = vmatmul.mubr.f32.gmra.mxu0 %v396
        %v587 = vpop.f32.mrf.mxu0
        %v588 = vadd.f32 %v347, %v587
        %v589 = vpop.f32.mrf.mxu0
        %590 = vmatprep.mubr.f32.mxu0 0.0
        %591 = vmatmul.mubr.f32.gmra.mxu0 %v399
        %v592 = vpop.f32.mrf.mxu0
        %v593 = vadd.f32 %v347, %v592
        %v594 = vpop.f32.mrf.mxu0
        %595 = vmatprep.mubr.f32.mxu0 0.0
        %596 = vmatmul.mubr.f32.gmra.mxu0 %v402
        %v597 = vpop.f32.mrf.mxu0
        %v598 = vadd.f32 %v347, %v597
        %v599 = vpop.f32.mrf.mxu0
        %600 = vmatprep.mubr.f32.mxu0 0.0
        %601 = vmatmul.mubr.f32.gmra.mxu0 %v405
        %v602 = vpop.f32.mrf.mxu0
        %v603 = vadd.f32 %v347, %v602
        %v604 = vpop.f32.mrf.mxu0
        %605 = vmatprep.mubr.f32.mxu0 0.0
        %606 = vmatmul.mubr.f32.gmra.mxu0 %v408
        %v607 = vpop.f32.mrf.mxu0
        %v608 = vadd.f32 %v347, %v607
        %v609 = vpop.f32.mrf.mxu0
        %610 = vmatprep.mubr.f32.mxu0 0.0
        %611 = vmatmul.mubr.f32.gmra.mxu0 %v411
        %v612 = vpop.f32.mrf.mxu0
        %v613 = vadd.f32 %v347, %v612
        %v614 = vpop.f32.mrf.mxu0
        %615 = vmatprep.mubr.f32.mxu0 0.0
        %616 = vmatmul.mubr.f32.gmra.mxu0 %v414
        %v617 = vpop.f32.mrf.mxu0
        %v618 = vadd.f32 %v347, %v617
        %v619 = vpop.f32.mrf.mxu0
        %620 = vmatprep.mubr.f32.mxu0 0.0
        %621 = vmatmul.mubr.f32.gmra.mxu0 %v417
        %v622 = vpop.f32.mrf.mxu0
        %v623 = vadd.f32 %v347, %v622
        %v624 = vpop.f32.mrf.mxu0
        %625 = vmatprep.mubr.f32.mxu0 0.0
        %626 = vmatmul.mubr.f32.gmra.mxu0 %v420
        %v627 = vpop.f32.mrf.mxu0
        %v628 = vadd.f32 %v347, %v627
        %v629 = vpop.f32.mrf.mxu0
        %630 = vmatprep.mubr.f32.mxu0 0.0
        %631 = vmatmul.mubr.f32.gmra.mxu0 %v423
        %v632 = vpop.f32.mrf.mxu0
        %v633 = vadd.f32 %v347, %v632
        %v634 = vpop.f32.mrf.mxu0
        %635 = vmatprep.mubr.f32.mxu0 0.0
        %636 = vmatmul.mubr.f32.gmra.mxu0 %v426
        %v637 = vpop.f32.mrf.mxu0
        %v638 = vadd.f32 %v347, %v637
        %v639 = vpop.f32.mrf.mxu0
        %640 = vmatprep.mubr.f32.mxu0 0.0
        %641 = vmatmul.mubr.f32.gmra.mxu0 %v429
        %v642 = vpop.f32.mrf.mxu0
        %v643 = vadd.f32 %v347, %v642
        %v644 = vpop.f32.mrf.mxu0
        %645 = vmatprep.mubr.f32.mxu0 0.0
        %646 = vmatmul.mubr.f32.gmra.mxu0 %v432
        %v647 = vpop.f32.mrf.mxu0
        %v648 = vadd.f32 %v347, %v647
        %v649 = vpop.f32.mrf.mxu0
        %650 = vmatprep.mubr.f32.mxu0 0.0
        %651 = vmatmul.mubr.f32.gmra.mxu0 %v435
        %v652 = vpop.f32.mrf.mxu0
        %v653 = vadd.f32 %v347, %v652
        %v654 = vpop.f32.mrf.mxu0
        %655 = vmatprep.mubr.f32.mxu0 0.0
        %656 = vmatmul.mubr.f32.gmra.mxu0 %v438
        %v657 = vpop.f32.mrf.mxu0
        %v658 = vadd.f32 %v347, %v657
        %v659 = vpop.f32.mrf.mxu0
        %660 = vmatprep.mubr.f32.mxu0 0.0
        %661 = vmatmul.mubr.f32.gmra.mxu0 %v441
        %v662 = vpop.f32.mrf.mxu0
        %v663 = vadd.f32 %v347, %v662
        %v664 = vpop.f32.mrf.mxu0
        %665 = vmatprep.mubr.f32.mxu0 0.0
        %666 = vmatmul.mubr.f32.gmra.mxu0 %v444
        %v667 = vpop.f32.mrf.mxu0
        %v668 = vadd.f32 %v347, %v667
        %v669 = vpop.f32.mrf.mxu0
        %670 = vdwg.mxu0
        %v671 = vmax.f32 %v513, 0.0
        %v672 = vmax.f32 %v518, 0.0
        %v673 = vmax.f32 %v523, 0.0
        %v674 = vmax.f32 %v528, 0.0
        %v675 = vmax.f32 %v533, 0.0
        %v676 = vmax.f32 %v538, 0.0
        %v677 = vmax.f32 %v543, 0.0
        %v678 = vmax.f32 %v548, 0.0
        %v679 = vmax.f32 %v553, 0.0
        %v680 = vmax.f32 %v558, 0.0
        %v681 = vmax.f32 %v563, 0.0
        %v682 = vmax.f32 %v568, 0.0
        %v683 = vmax.f32 %v573, 0.0
        %v684 = vmax.f32 %v578, 0.0
        %v685 = vmax.f32 %v583, 0.0
        %v686 = vmax.f32 %v588, 0.0
        %v687 = vmax.f32 %v593, 0.0
        %v688 = vmax.f32 %v598, 0.0
        %v689 = vmax.f32 %v603, 0.0
        %v690 = vmax.f32 %v608, 0.0
        %v691 = vmax.f32 %v613, 0.0
        %v692 = vmax.f32 %v618, 0.0
        %v693 = vmax.f32 %v623, 0.0
        %v694 = vmax.f32 %v628, 0.0
        %v695 = vmax.f32 %v633, 0.0
        %v696 = vmax.f32 %v638, 0.0
        %v697 = vmax.f32 %v643, 0.0
        %v698 = vmax.f32 %v648, 0.0
        %v699 = vmax.f32 %v653, 0.0
        %v700 = vmax.f32 %v658, 0.0
        %v701 = vmax.f32 %v663, 0.0
        %v702 = vmax.f32 %v668, 0.0
        %v703 = vld [vmem:[%s3] sm:$0xff]
        %v704 = vld [vmem:[%s3 + $0x8] sm:$0xff]
        %v705 = vld [vmem:[%s3 + $0x10] sm:$0xff]
        %v706 = vld [vmem:[%s3 + $0x18] sm:$0xff]
        %v707 = vld [vmem:[%s3 + $0x20] sm:$0xff]
        %v708 = vld [vmem:[%s3 + $0x28] sm:$0xff]
        %v709 = vld [vmem:[%s3 + $0x30] sm:$0xff]
        %v710 = vld [vmem:[%s3 + $0x38] sm:$0xff]
        %v711 = vld [vmem:[%s3 + $0x40] sm:$0xff]
        %v712 = vld [vmem:[%s3 + $0x48] sm:$0xff]
        %v713 = vld [vmem:[%s3 + $0x50] sm:$0xff]
        %v714 = vld [vmem:[%s3 + $0x58] sm:$0xff]
        %v715 = vld [vmem:[%s3 + $0x60] sm:$0xff]
        %v716 = vld [vmem:[%s3 + $0x68] sm:$0xff]
        %v717 = vld [vmem:[%s3 + $0x70] sm:$0xff]
        %v718 = vld [vmem:[%s3 + $0x78] sm:$0xff]
        %v719 = vld [vmem:[%s4] sm:$0xff]
        %v720 = vld [vmem:[%s4 + $0x8] sm:$0xff]
        %v721 = vld [vmem:[%s4 + $0x10] sm:$0xff]
        %v722 = vld [vmem:[%s4 + $0x18] sm:$0xff]
        %v723 = vld [vmem:[%s4 + $0x20] sm:$0xff]
        %v724 = vld [vmem:[%s4 + $0x28] sm:$0xff]
        %v725 = vld [vmem:[%s4 + $0x30] sm:$0xff]
        %v726 = vld [vmem:[%s4 + $0x38] sm:$0xff]
        %v727 = vld [vmem:[%s4 + $0x40] sm:$0xff]
        %v728 = vld [vmem:[%s4 + $0x48] sm:$0xff]
        %v729 = vld [vmem:[%s4 + $0x50] sm:$0xff]
        %v730 = vld [vmem:[%s4 + $0x58] sm:$0xff]
        %v731 = vld [vmem:[%s4 + $0x60] sm:$0xff]
        %v732 = vld [vmem:[%s4 + $0x68] sm:$0xff]
        %v733 = vld [vmem:[%s4 + $0x70] sm:$0xff]
        %v734 = vld [vmem:[%s4 + $0x78] sm:$0xff]
        %736 = vset.pattern.permute.xlu0 0
        %737 = vperm.xlu0 %736, %v719
        %v738 = vpop.permute.xlu0 %737
        %741 = vset.pattern.permute.xlu0 0
        %742 = vperm.xlu0 %741, %v720
        %v743 = vpop.permute.xlu0 %742
        %746 = vset.pattern.permute.xlu0 0
        %747 = vperm.xlu0 %746, %v721
        %v748 = vpop.permute.xlu0 %747
        %751 = vset.pattern.permute.xlu0 0
        %752 = vperm.xlu0 %751, %v722
        %v753 = vpop.permute.xlu0 %752
        %756 = vset.pattern.permute.xlu0 0
        %757 = vperm.xlu0 %756, %v723
        %v758 = vpop.permute.xlu0 %757
        %761 = vset.pattern.permute.xlu0 0
        %762 = vperm.xlu0 %761, %v724
        %v763 = vpop.permute.xlu0 %762
        %766 = vset.pattern.permute.xlu0 0
        %767 = vperm.xlu0 %766, %v725
        %v768 = vpop.permute.xlu0 %767
        %771 = vset.pattern.permute.xlu0 0
        %772 = vperm.xlu0 %771, %v726
        %v773 = vpop.permute.xlu0 %772
        %776 = vset.pattern.permute.xlu0 0
        %777 = vperm.xlu0 %776, %v727
        %v778 = vpop.permute.xlu0 %777
        %781 = vset.pattern.permute.xlu0 0
        %782 = vperm.xlu0 %781, %v728
        %v783 = vpop.permute.xlu0 %782
        %786 = vset.pattern.permute.xlu0 0
        %787 = vperm.xlu0 %786, %v729
        %v788 = vpop.permute.xlu0 %787
        %791 = vset.pattern.permute.xlu0 0
        %792 = vperm.xlu0 %791, %v730
        %v793 = vpop.permute.xlu0 %792
        %796 = vset.pattern.permute.xlu0 0
        %797 = vperm.xlu0 %796, %v731
        %v798 = vpop.permute.xlu0 %797
        %801 = vset.pattern.permute.xlu0 0
        %802 = vperm.xlu0 %801, %v732
        %v803 = vpop.permute.xlu0 %802
        %806 = vset.pattern.permute.xlu0 0
        %807 = vperm.xlu0 %806, %v733
        %v808 = vpop.permute.xlu0 %807
        %811 = vset.pattern.permute.xlu0 0
        %812 = vperm.xlu0 %811, %v734
        %v813 = vpop.permute.xlu0 %812
        %815 = vmatprep.subr.mxu0 0.0
        %816 = vmatpush1.xpose.msra.mxu0 %v686
        %817 = vmatprep.subr.mxu0 0.0
        %818 = vmatpush1.xpose.msra.mxu0 %v685
        %819 = vmatprep.subr.mxu0 0.0
        %820 = vmatpush1.xpose.msra.mxu0 %v684
        %821 = vmatprep.subr.mxu0 0.0
        %822 = vmatpush1.xpose.msra.mxu0 %v683
        %823 = vmatprep.subr.mxu0 0.0
        %824 = vmatpush1.xpose.msra.mxu0 %v682
        %825 = vmatprep.subr.mxu0 0.0
        %826 = vmatpush1.xpose.msra.mxu0 %v681
        %827 = vmatprep.subr.mxu0 0.0
        %828 = vmatpush1.xpose.msra.mxu0 %v680
        %829 = vmatprep.subr.mxu0 0.0
        %830 = vmatpush1.xpose.msra.mxu0 %v679
        %831 = vmatprep.subr.mxu0 0.0
        %832 = vmatpush1.xpose.msra.mxu0 %v678
        %833 = vmatprep.subr.mxu0 0.0
        %834 = vmatpush1.xpose.msra.mxu0 %v677
        %835 = vmatprep.subr.mxu0 0.0
        %836 = vmatpush1.xpose.msra.mxu0 %v676
        %837 = vmatprep.subr.mxu0 0.0
        %838 = vmatpush1.xpose.msra.mxu0 %v675
        %839 = vmatprep.subr.mxu0 0.0
        %840 = vmatpush1.xpose.msra.mxu0 %v674
        %841 = vmatprep.subr.mxu0 0.0
        %842 = vmatpush1.xpose.msra.mxu0 %v673
        %843 = vmatprep.subr.mxu0 0.0
        %844 = vmatpush1.xpose.msra.mxu0 %v672
        %845 = vmatprep.subr.mxu0 0.0
        %846 = vmatpush1.xpose.msra.mxu0 %v671
        %847 = vmatprep.subr.mxu0 0.0
        %848 = vmatpush2.xpose.msra.mxu0 %v702
        %849 = vmatprep.subr.mxu0 0.0
        %850 = vmatpush2.xpose.msra.mxu0 %v701
        %851 = vmatprep.subr.mxu0 0.0
        %852 = vmatpush2.xpose.msra.mxu0 %v700
        %853 = vmatprep.subr.mxu0 0.0
        %854 = vmatpush2.xpose.msra.mxu0 %v699
        %855 = vmatprep.subr.mxu0 0.0
        %856 = vmatpush2.xpose.msra.mxu0 %v698
        %857 = vmatprep.subr.mxu0 0.0
        %858 = vmatpush2.xpose.msra.mxu0 %v697
        %859 = vmatprep.subr.mxu0 0.0
        %860 = vmatpush2.xpose.msra.mxu0 %v696
        %861 = vmatprep.subr.mxu0 0.0
        %862 = vmatpush2.xpose.msra.mxu0 %v695
        %863 = vmatprep.subr.mxu0 0.0
        %864 = vmatpush2.xpose.msra.mxu0 %v694
        %865 = vmatprep.subr.mxu0 0.0
        %866 = vmatpush2.xpose.msra.mxu0 %v693
        %867 = vmatprep.subr.mxu0 0.0
        %868 = vmatpush2.xpose.msra.mxu0 %v692
        %869 = vmatprep.subr.mxu0 0.0
        %870 = vmatpush2.xpose.msra.mxu0 %v691
        %871 = vmatprep.subr.mxu0 0.0
        %872 = vmatpush2.xpose.msra.mxu0 %v690
        %873 = vmatprep.subr.mxu0 0.0
        %874 = vmatpush2.xpose.msra.mxu0 %v689
        %875 = vmatprep.subr.mxu0 0.0
        %876 = vmatpush2.xpose.msra.mxu0 %v688
        %877 = vmatprep.subr.mxu0 0.0
        %878 = vmatpush2.xpose.msra.mxu0 %v687
        %879 = vmatprep.mubr.f32.mxu0 0.0
        %880 = vmatmul.mubr.f32.gmra.mxu0 %v703
        %v881 = vpop.f32.mrf.mxu0
        %v882 = vadd.f32 %v738, %v881
        %v883 = vpop.f32.mrf.mxu0
        %v884 = vadd.f32 %v738, %v883
        %885 = vmatprep.mubr.f32.mxu0 0.0
        %886 = vmatmul.mubr.f32.gmra.mxu0 %v704
        %v887 = vpop.f32.mrf.mxu0
        %v888 = vadd.f32 %v743, %v887
        %v889 = vpop.f32.mrf.mxu0
        %v890 = vadd.f32 %v743, %v889
        %891 = vmatprep.mubr.f32.mxu0 0.0
        %892 = vmatmul.mubr.f32.gmra.mxu0 %v705
        %v893 = vpop.f32.mrf.mxu0
        %v894 = vadd.f32 %v748, %v893
        %v895 = vpop.f32.mrf.mxu0
        %v896 = vadd.f32 %v748, %v895
        %897 = vmatprep.mubr.f32.mxu0 0.0
        %898 = vmatmul.mubr.f32.gmra.mxu0 %v706
        %v899 = vpop.f32.mrf.mxu0
        %v900 = vadd.f32 %v753, %v899
        %v901 = vpop.f32.mrf.mxu0
        %v902 = vadd.f32 %v753, %v901
        %903 = vmatprep.mubr.f32.mxu0 0.0
        %904 = vmatmul.mubr.f32.gmra.mxu0 %v707
        %v905 = vpop.f32.mrf.mxu0
        %v906 = vadd.f32 %v758, %v905
        %v907 = vpop.f32.mrf.mxu0
        %v908 = vadd.f32 %v758, %v907
        %909 = vmatprep.mubr.f32.mxu0 0.0
        %910 = vmatmul.mubr.f32.gmra.mxu0 %v708
        %v911 = vpop.f32.mrf.mxu0
        %v912 = vadd.f32 %v763, %v911
        %v913 = vpop.f32.mrf.mxu0
        %v914 = vadd.f32 %v763, %v913
        %915 = vmatprep.mubr.f32.mxu0 0.0
        %916 = vmatmul.mubr.f32.gmra.mxu0 %v709
        %v917 = vpop.f32.mrf.mxu0
        %v918 = vadd.f32 %v768, %v917
        %v919 = vpop.f32.mrf.mxu0
        %v920 = vadd.f32 %v768, %v919
        %921 = vmatprep.mubr.f32.mxu0 0.0
        %922 = vmatmul.mubr.f32.gmra.mxu0 %v710
        %v923 = vpop.f32.mrf.mxu0
        %v924 = vadd.f32 %v773, %v923
        %v925 = vpop.f32.mrf.mxu0
        %v926 = vadd.f32 %v773, %v925
        %927 = vmatprep.mubr.f32.mxu0 0.0
        %928 = vmatmul.mubr.f32.gmra.mxu0 %v711
        %v929 = vpop.f32.mrf.mxu0
        %v930 = vadd.f32 %v778, %v929
        %v931 = vpop.f32.mrf.mxu0
        %v932 = vadd.f32 %v778, %v931
        %933 = vmatprep.mubr.f32.mxu0 0.0
        %934 = vmatmul.mubr.f32.gmra.mxu0 %v712
        %v935 = vpop.f32.mrf.mxu0
        %v936 = vadd.f32 %v783, %v935
        %v937 = vpop.f32.mrf.mxu0
        %v938 = vadd.f32 %v783, %v937
        %939 = vmatprep.mubr.f32.mxu0 0.0
        %940 = vmatmul.mubr.f32.gmra.mxu0 %v713
        %v941 = vpop.f32.mrf.mxu0
        %v942 = vadd.f32 %v788, %v941
        %v943 = vpop.f32.mrf.mxu0
        %v944 = vadd.f32 %v788, %v943
        %945 = vmatprep.mubr.f32.mxu0 0.0
        %946 = vmatmul.mubr.f32.gmra.mxu0 %v714
        %v947 = vpop.f32.mrf.mxu0
        %v948 = vadd.f32 %v793, %v947
        %v949 = vpop.f32.mrf.mxu0
        %v950 = vadd.f32 %v793, %v949
        %951 = vmatprep.mubr.f32.mxu0 0.0
        %952 = vmatmul.mubr.f32.gmra.mxu0 %v715
        %v953 = vpop.f32.mrf.mxu0
        %v954 = vadd.f32 %v798, %v953
        %v955 = vpop.f32.mrf.mxu0
        %v956 = vadd.f32 %v798, %v955
        %957 = vmatprep.mubr.f32.mxu0 0.0
        %958 = vmatmul.mubr.f32.gmra.mxu0 %v716
        %v959 = vpop.f32.mrf.mxu0
        %v960 = vadd.f32 %v803, %v959
        %v961 = vpop.f32.mrf.mxu0
        %v962 = vadd.f32 %v803, %v961
        %963 = vmatprep.mubr.f32.mxu0 0.0
        %964 = vmatmul.mubr.f32.gmra.mxu0 %v717
        %v965 = vpop.f32.mrf.mxu0
        %v966 = vadd.f32 %v808, %v965
        %v967 = vpop.f32.mrf.mxu0
        %v968 = vadd.f32 %v808, %v967
        %969 = vmatprep.mubr.f32.mxu0 0.0
        %970 = vmatmul.mubr.f32.gmra.mxu0 %v718
        %v971 = vpop.f32.mrf.mxu0
        %v972 = vadd.f32 %v813, %v971
        %v973 = vpop.f32.mrf.mxu0
        %v974 = vadd.f32 %v813, %v973
        %975 = vdwg.mxu0
        %v976 = vmax.f32 %v882, 0.0
        %v977 = vmax.f32 %v884, 0.0
        %v978 = vmax.f32 %v888, 0.0
        %v979 = vmax.f32 %v890, 0.0
        %v980 = vmax.f32 %v894, 0.0
        %v981 = vmax.f32 %v896, 0.0
        %v982 = vmax.f32 %v900, 0.0
        %v983 = vmax.f32 %v902, 0.0
        %v984 = vmax.f32 %v906, 0.0
        %v985 = vmax.f32 %v908, 0.0
        %v986 = vmax.f32 %v912, 0.0
        %v987 = vmax.f32 %v914, 0.0
        %v988 = vmax.f32 %v918, 0.0
        %v989 = vmax.f32 %v920, 0.0
        %v990 = vmax.f32 %v924, 0.0
        %v991 = vmax.f32 %v926, 0.0
        %v992 = vmax.f32 %v930, 0.0
        %v993 = vmax.f32 %v932, 0.0
        %v994 = vmax.f32 %v936, 0.0
        %v995 = vmax.f32 %v938, 0.0
        %v996 = vmax.f32 %v942, 0.0
        %v997 = vmax.f32 %v944, 0.0
        %v998 = vmax.f32 %v948, 0.0
        %v999 = vmax.f32 %v950, 0.0
        %v1000 = vmax.f32 %v954, 0.0
        %v1001 = vmax.f32 %v956, 0.0
        %v1002 = vmax.f32 %v960, 0.0
        %v1003 = vmax.f32 %v962, 0.0
        %v1004 = vmax.f32 %v966, 0.0
        %v1005 = vmax.f32 %v968, 0.0
        %v1006 = vmax.f32 %v972, 0.0
        %v1007 = vmax.f32 %v974, 0.0
        %v1008 = vld [vmem:[%s5] sm:$0xff]
        %v1009 = vld [vmem:[%s5 + $0x8] sm:$0xff]
        %v1010 = vld [vmem:[%s5 + $0x10] sm:$0xff]
        %v1011 = vld [vmem:[%s5 + $0x18] sm:$0xff]
        %v1012 = vld [vmem:[%s5 + $0x20] sm:$0xff]
        %v1013 = vld [vmem:[%s5 + $0x28] sm:$0xff]
        %v1014 = vld [vmem:[%s5 + $0x30] sm:$0xff]
        %v1015 = vld [vmem:[%s5 + $0x38] sm:$0xff]
        %v1016 = vld [vmem:[%s5 + $0x40] sm:$0xff]
        %v1017 = vld [vmem:[%s5 + $0x48] sm:$0xff]
        %v1018 = vld [vmem:[%s5 + $0x50] sm:$0xff]
        %v1019 = vld [vmem:[%s5 + $0x58] sm:$0xff]
        %v1020 = vld [vmem:[%s5 + $0x60] sm:$0xff]
        %v1021 = vld [vmem:[%s5 + $0x68] sm:$0xff]
        %v1022 = vld [vmem:[%s5 + $0x70] sm:$0xff]
        %v1023 = vld [vmem:[%s5 + $0x78] sm:$0xff]
        %1025 = vset.pattern.permute.xlu0 0
        %1026 = vperm.xlu0 %1025, %v1008
        %v1027 = vpop.permute.xlu0 %1026
        %1030 = vset.pattern.permute.xlu0 0
        %1031 = vperm.xlu0 %1030, %v1009
        %v1032 = vpop.permute.xlu0 %1031
        %1035 = vset.pattern.permute.xlu0 0
        %1036 = vperm.xlu0 %1035, %v1010
        %v1037 = vpop.permute.xlu0 %1036
        %1040 = vset.pattern.permute.xlu0 0
        %1041 = vperm.xlu0 %1040, %v1011
        %v1042 = vpop.permute.xlu0 %1041
        %1045 = vset.pattern.permute.xlu0 0
        %1046 = vperm.xlu0 %1045, %v1012
        %v1047 = vpop.permute.xlu0 %1046
        %1050 = vset.pattern.permute.xlu0 0
        %1051 = vperm.xlu0 %1050, %v1013
        %v1052 = vpop.permute.xlu0 %1051
        %1055 = vset.pattern.permute.xlu0 0
        %1056 = vperm.xlu0 %1055, %v1014
        %v1057 = vpop.permute.xlu0 %1056
        %1060 = vset.pattern.permute.xlu0 0
        %1061 = vperm.xlu0 %1060, %v1015
        %v1062 = vpop.permute.xlu0 %1061
        %1065 = vset.pattern.permute.xlu0 0
        %1066 = vperm.xlu0 %1065, %v1016
        %v1067 = vpop.permute.xlu0 %1066
        %1070 = vset.pattern.permute.xlu0 0
        %1071 = vperm.xlu0 %1070, %v1017
        %v1072 = vpop.permute.xlu0 %1071
        %1075 = vset.pattern.permute.xlu0 0
        %1076 = vperm.xlu0 %1075, %v1018
        %v1077 = vpop.permute.xlu0 %1076
        %1080 = vset.pattern.permute.xlu0 0
        %1081 = vperm.xlu0 %1080, %v1019
        %v1082 = vpop.permute.xlu0 %1081
        %1085 = vset.pattern.permute.xlu0 0
        %1086 = vperm.xlu0 %1085, %v1020
        %v1087 = vpop.permute.xlu0 %1086
        %1090 = vset.pattern.permute.xlu0 0
        %1091 = vperm.xlu0 %1090, %v1021
        %v1092 = vpop.permute.xlu0 %1091
        %1095 = vset.pattern.permute.xlu0 0
        %1096 = vperm.xlu0 %1095, %v1022
        %v1097 = vpop.permute.xlu0 %1096
        %1100 = vset.pattern.permute.xlu0 0
        %1101 = vperm.xlu0 %1100, %v1023
        %v1102 = vpop.permute.xlu0 %1101
        %v1104 = vmul.f32 %v976, %v1027
        %v1105 = vmul.f32 %v977, %v1027
        %v1106 = vmul.f32 %v978, %v1032
        %v1107 = vmul.f32 %v979, %v1032
        %v1108 = vmul.f32 %v980, %v1037
        %v1109 = vmul.f32 %v981, %v1037
        %v1110 = vmul.f32 %v982, %v1042
        %v1111 = vmul.f32 %v983, %v1042
        %v1112 = vmul.f32 %v984, %v1047
        %v1113 = vmul.f32 %v985, %v1047
        %v1114 = vmul.f32 %v986, %v1052
        %v1115 = vmul.f32 %v987, %v1052
        %v1116 = vmul.f32 %v988, %v1057
        %v1117 = vmul.f32 %v989, %v1057
        %v1118 = vmul.f32 %v990, %v1062
        %v1119 = vmul.f32 %v991, %v1062
        %v1120 = vmul.f32 %v992, %v1067
        %v1121 = vmul.f32 %v993, %v1067
        %v1122 = vmul.f32 %v994, %v1072
        %v1123 = vmul.f32 %v995, %v1072
        %v1124 = vmul.f32 %v996, %v1077
        %v1125 = vmul.f32 %v997, %v1077
        %v1126 = vmul.f32 %v998, %v1082
        %v1127 = vmul.f32 %v999, %v1082
        %v1128 = vmul.f32 %v1000, %v1087
        %v1129 = vmul.f32 %v1001, %v1087
        %v1130 = vmul.f32 %v1002, %v1092
        %v1131 = vmul.f32 %v1003, %v1092
        %v1132 = vmul.f32 %v1004, %v1097
        %v1133 = vmul.f32 %v1005, %v1097
        %v1134 = vmul.f32 %v1006, %v1102
        %v1135 = vmul.f32 %v1007, %v1102
        %v1136 = vadd.f32 %v1104, %v1106
        %v1137 = vadd.f32 %v1136, %v1108
        %v1138 = vadd.f32 %v1137, %v1110
        %v1139 = vadd.f32 %v1138, %v1112
        %v1140 = vadd.f32 %v1139, %v1114
        %v1141 = vadd.f32 %v1140, %v1116
        %v1142 = vadd.f32 %v1141, %v1118
        %v1143 = vadd.f32 %v1142, %v1120
        %v1144 = vadd.f32 %v1143, %v1122
        %v1145 = vadd.f32 %v1144, %v1124
        %v1146 = vadd.f32 %v1145, %v1126
        %v1147 = vadd.f32 %v1146, %v1128
        %v1148 = vadd.f32 %v1147, %v1130
        %v1149 = vadd.f32 %v1148, %v1132
        %v1150 = vadd.f32 %v1149, %v1134
        %v1151 = vrot.slane %v1150, 4
        %v1152 = vadd.f32 %v1150, %v1151
        %v1153 = vrot.slane %v1152, 2
        %v1154 = vadd.f32 %v1152, %v1153
        %v1155 = vrot.slane %v1154, 1
        %v1156 = vadd.f32 %v1154, %v1155
        %v1157 = vadd.f32 %v1105, %v1107
        %v1158 = vadd.f32 %v1157, %v1109
        %v1159 = vadd.f32 %v1158, %v1111
        %v1160 = vadd.f32 %v1159, %v1113
        %v1161 = vadd.f32 %v1160, %v1115
        %v1162 = vadd.f32 %v1161, %v1117
        %v1163 = vadd.f32 %v1162, %v1119
        %v1164 = vadd.f32 %v1163, %v1121
        %v1165 = vadd.f32 %v1164, %v1123
        %v1166 = vadd.f32 %v1165, %v1125
        %v1167 = vadd.f32 %v1166, %v1127
        %v1168 = vadd.f32 %v1167, %v1129
        %v1169 = vadd.f32 %v1168, %v1131
        %v1170 = vadd.f32 %v1169, %v1133
        %v1171 = vadd.f32 %v1170, %v1135
        %v1172 = vrot.slane %v1171, 4
        %v1173 = vadd.f32 %v1171, %v1172
        %v1174 = vrot.slane %v1173, 2
        %v1175 = vadd.f32 %v1173, %v1174
        %v1176 = vrot.slane %v1175, 1
        %v1177 = vadd.f32 %v1175, %v1176
        %v1178 = vld [vmem:[#allocation2] sm:$0x1]
        %1180 = vset.pattern.permute.xlu0 0
        %1181 = vperm.xlu0 %1180, %v1178
        %v1182 = vpop.permute.xlu0 %1181
        %v1184 = vlaneseq
        %v1185 = vshrl.u32 %v1184, 7
        %v1186 = vsub.s32 0, %v1185
        %v1187 = vrot.slane %v1182, %v1186
        %v1188 = vadd.f32 %v1156, %v1187
        %v1189 = vadd.f32 %v1177, %v1187
        %v1192 = vcombine.low %v1188, %v1189
        %v1194 = vunpack.c.l.s4 1966171168
        %v1195 = vunpack.c.0.s8 %v1194
        %v1196 = vlaneseq
        %v1197 = vshrl.u32 %v1196, 7
        %v1198 = vsub.s32 %v1195, %v1197
        %v1199 = vrot.slane %v1192, %v1198
        %v1201 = vunpack.c.l.s4 1966171168
        %v1202 = vunpack.c.0.s8 %v1201
        %v1203 = vlaneseq
        %v1204 = vshrl.u32 %v1203, 7
        %v1205 = vsub.s32 %v1202, %v1204
        %v1206 = vrot.slane %v1199, %v1205
        %v1208 = vlaneseq
        %vm1209 = vcmp.ge.s32.totalorder %v1208, 0
        %vm1210 = vcmp.lt.s32.totalorder %v1208, 256
        %vm1211 = vmand %vm1209, %vm1210
        %1212 = vst.msk [vmem:[%s286] sm:$0x3] %vm1211, %v1206
        %s1213 = sand.u32 %s183, 1
        %s1214 = scalar_lea.sflag [#allocation4], %s1213
        %s1215 = sand.u32 %s183, 1
        %s1216 = smul.addr %s1215, 2
        %s1217 = scalar_lea.vmem [#allocation3], %s1216
        // Predicated region
        $region49: #{tpu_custom_call.1} parent=47 // pred_check
          %p1218 = pneg %p193
        $region50: #{tpu_custom_call.1} parent=47 // pred_check_branch
          %1220 = sbr.rel (%p1218) target = $region52
        $region51: #{tpu_custom_call.1} parent=47 // pred_region
          %s1221 = smul.u32 2, %s23
          %s1222 = ssub.s32 5, %s1221
          %p1223 = scmp.lt.s32.totalorder %s1222, 2
          %s1224 = scalar_select %p1223, %s1222, 2
          %s1225 = smul.u32 16, %s1224
          %s1227 = ssub.s32 32, %s1225
          %1228 = vsyncadd %s1214, %s1227
          %p1229 = scmp.ne.s32.totalorder 0, %s1225
          %s1230 = smul.addr %s1221, 16
          %s1231 = scalar_lea.hbm %s7, %s1230
          %s1232 = sshll.u32 %s1224, 4
          %s1233 = sshll.u32 %s1217, 4
          %s1234 = int_to_ptr.vmem [resolvable:$true] %s1233
          %1236 = dma.vmem_to_hbm [thread:$0]  (%p1229), %s1234, %s1232, %s1231, %s1214
        $region52: #{tpu_custom_call.1} parent=47 // pred_fallthru
          _
      $region48: #{tpu_custom_call.1} parent=5 // pred_fallthru
        _
      %p1237 = scmp.le.s32.totalorder 2, %s18
      // Predicated region
      $region53: #{tpu_custom_call.1} parent=5 // pred_check
        %p1238 = pneg %p1237
      $region54: #{tpu_custom_call.1} parent=5 // pred_check_branch
        %1240 = sbr.rel (%p1238) target = $region56
      $region55: #{tpu_custom_call.1} parent=5 // pred_region
        %s1241 = ssub.s32 %s18, 2
        // Predicated region
        $region57: #{tpu_custom_call.1} parent=55 // pred_check
          %p1242 = pneg %p199
        $region58: #{tpu_custom_call.1} parent=55 // pred_check_branch
          %1244 = sbr.rel (%p1242) target = $region60
        $region59: #{tpu_custom_call.1} parent=55 // pred_region
          %s1245 = sand.u32 %s184, 1
          %s1246 = scalar_lea.sflag [#allocation4], %s1245
          %s1247 = sand.u32 %s184, 1
          %s1248 = smul.addr %s1247, 2
          %s1249 = scalar_lea.vmem [#allocation3], %s1248
          %1250 = dma.done %s1246, 32
        $region60: #{tpu_custom_call.1} parent=55 // pred_fallthru
          _
      $region56: #{tpu_custom_call.1} parent=5 // pred_fallthru
        _
    $region6: #{tpu_custom_call.1} parent=1 // loop_footer
      %s22 = sadd.s32 1, %s18
    $region7: #{tpu_custom_call.1} parent=1 // loop_footer_branch
      %17 = sbr.rel target = $region3
    $region8: #{tpu_custom_call.1} parent=1 // loop_exit
      _
    %1251 = vsyncpa [#allocation4], 1
    %s1252 = scalar_lea.sflag [#allocation4], 1
    %1253 = vsyncpa %s1252, 1

</llo_original>
